<compile_context>
chip_gen: v7x
topology: tpu7x:2x2x1
jax: 0.10.0
libtpu: 0.0.40
codegen_flags: <defaults>
</compile_context>

<pallas_src>
import jax
import jax.numpy as jnp
from jax.experimental import pallas as pl
from jax.experimental.pallas import tpu as pltpu


def _round_up(x: int, m: int) -> int:
    return ((x + m - 1) // m) * m


def _cdiv(a: int, b: int) -> int:
    return -(-a // b)


def _largest_divisor_tile(total: int, cap: int, unit: int = 128) -> int:
    """Largest multiple of `unit` that divides `total` and is <= cap (>= unit)."""
    cap = min(cap, total)
    best, d = unit, unit
    while d <= cap:
        if total % d == 0:
            best = d
        d += unit
    return best


def _device_info():
    kind = ""
    try:
        kind = jax.devices()[0].device_kind.lower()
    except Exception:
        pass
    vmem_cap = None
    try:
        vmem_cap = int(pltpu.get_tpu_info().vmem_capacity_bytes)
    except Exception:
        pass
    if vmem_cap is None:
        vmem_cap = (64 << 20) if "v7" in kind else (128 << 20)
    num_cores = 2 if "v7" in kind else 1
    return kind, vmem_cap, num_cores


def _select_tiles(M, d_model_p, d_ff_p, x_bytes, out_bytes):
    kind, vmem_cap, num_cores = _device_info()

    # Weight-reuse roofline: arithmetic intensity ~= tm FLOPs/byte of streamed weight.
    if "v6" in kind:
        tm_target = 1024
    elif "v7" in kind:
        tm_target = 512
    else:                       # v5e and unknown
        tm_target = 512

    # VMEM budget: leave headroom for compiler-internal scratch; never request the
    # full physical VMEM (esp. on v7x's 64 MiB per TensorCore).
    budget = min(max(vmem_cap - (12 << 20), 16 << 20), 100 << 20)

    if M <= 256:
        tm = _round_up(M, 8)
    else:
        tm = min(tm_target, _round_up(M, 256))   # 256-multiple for MXU occupancy
        # v7x megacore: make sure the parallel M axis has >= 2 tiles.
        if num_cores >= 2 and _cdiv(M, tm) == 1:
            tm = max(256, _round_up(_cdiv(M, 2), 256))

    tf = _largest_divisor_tile(d_ff_p, 2048)

    def est(tm_, tf_):
        return (2 * tm_ * d_model_p * x_bytes            # x tiles (double-buffered)
                + 2 * d_model_p * tf_ * 2                # w1 chunks (bf16)
                + 2 * tf_ * d_model_p * 2                # w2 chunks (bf16)
                + 2 * 8 * tf_ * 4 + 2 * 8 * d_model_p * 4  # biases (sublane-padded)
                + 2 * tm_ * d_model_p * out_bytes        # out tiles
                + tm_ * d_model_p * 4                    # f32 accumulator scratch
                + tm_ * tf_ * 4)                         # in-flight hidden tile

    # Shrink tf first (keeps divisibility of d_ff_p), then tm, until within budget.
    while est(tm, tf) > budget:
        if tf > 128:
            tf = _largest_divisor_tile(d_ff_p, tf - 128)
        elif tm > 256:
            tm = max(256, tm // 2)
        elif tm > 8:
            tm = max(8, _round_up(tm // 2, 8))
        else:
            break

    return tm, tf, est(tm, tf), budget


def _ffn_kernel(x_ref, w1_ref, b1_ref, w2_ref, b2_ref, o_ref, acc_ref):
    # x_ref:  (tm, d_model_p) in x dtype   w1_ref: (d_model_p, tf) bf16
    # b1_ref: (1, tf) f32                  w2_ref: (tf, d_model_p) bf16
    # b2_ref: (1, d_model_p) f32           o_ref:  (tm, d_model_p) out dtype
    # acc_ref: (tm, d_model_p) f32 scratch accumulator over the d_ff chunks.
    k = pl.program_id(1)

    @pl.when(k == 0)
    def _():
        acc_ref[...] = jnp.zeros_like(acc_ref)

    # Cast activations to bf16 in-kernel (no HBM re-materialization of x).
    x_bf16 = x_ref[...].astype(jnp.bfloat16)

    # First matmul chunk: (tm, d_model) @ (d_model, tf) -> f32 (tm, tf)
    h = jnp.dot(x_bf16, w1_ref[...], preferred_element_type=jnp.float32)
    h = h + b1_ref[...]           # per-chunk slice of bias 1
    h = jnp.maximum(h, 0.0)       # ReLU
    # Dropout: PyTorch nn.Dropout is identity in eval mode.
    # TODO(synk): training-mode dropout would use pltpu.prng_seed +
    # pltpu.prng_random_bits to build a keep mask and scale by 1/(1-p).

    # Second matmul chunk: (tm, tf) @ (tf, d_model) accumulated in f32.
    acc_ref[...] += jnp.dot(h.astype(jnp.bfloat16), w2_ref[...],
                            preferred_element_type=jnp.float32)

    @pl.when(k == pl.num_programs(1) - 1)
    def _():
        o_ref[...] = (acc_ref[...] + b2_ref[...]).astype(o_ref.dtype)


def prepare_ffn_params(w1, b1, w2, b2):
    """Hoisted, one-time pad + bf16 cast of the weights.

    w1: (d_model, d_ff), w2: (d_ff, d_model) — i.e. PyTorch nn.Linear weights
    pre-transposed to (in, out).  Biases stay f32."""
    d_model, d_ff = w1.shape
    assert w2.shape == (d_ff, d_model)
    d_model_p = _round_up(d_model, 128)
    d_ff_p = _round_up(d_ff, 128)
    w1_p = jnp.zeros((d_model_p, d_ff_p), jnp.bfloat16)
    w1_p = w1_p.at[:d_model, :d_ff].set(w1.astype(jnp.bfloat16))
    w2_p = jnp.zeros((d_ff_p, d_model_p), jnp.bfloat16)
    w2_p = w2_p.at[:d_ff, :d_model].set(w2.astype(jnp.bfloat16))
    b1_p = jnp.zeros((1, d_ff_p), jnp.float32).at[0, :d_ff].set(b1.astype(jnp.float32))
    b2_p = jnp.zeros((1, d_model_p), jnp.float32).at[0, :d_model].set(b2.astype(jnp.float32))
    return dict(w1=w1_p, b1=b1_p, w2=w2_p, b2=b2_p,
                d_model=d_model, d_ff=d_ff,
                d_model_p=d_model_p, d_ff_p=d_ff_p)


def feed_forward_block(x, params, *, tm=None, tf=None):
    """x: (batch, seq, d_model); params from prepare_ffn_params.
    Returns (batch, seq, d_model) in x.dtype."""
    out_dtype = x.dtype
    batch, seq, d_model = x.shape
    assert d_model == params["d_model"]
    d_model_p, d_ff_p = params["d_model_p"], params["d_ff_p"]
    M = batch * seq

    x_bytes = jnp.dtype(x.dtype).itemsize
    out_bytes = jnp.dtype(out_dtype).itemsize
    auto_tm, auto_tf, est_vmem, budget = _select_tiles(
        M, d_model_p, d_ff_p, x_bytes, out_bytes)
    tm = auto_tm if tm is None else tm
    tf = auto_tf if tf is None else tf
    assert d_ff_p % tf == 0
    M_p = _round_up(M, tm)

    # Skip the activation pre-pass entirely when shapes already line up.
    needs_pad = (M_p != M) or (d_model_p != d_model)
    x2d = x.reshape(M, d_model)
    if needs_pad:
        x2d = jnp.zeros((M_p, d_model_p), x.dtype).at[:M, :d_model].set(x2d)

    grid = (M_p // tm, d_ff_p // tf)

    cp_kwargs = dict(dimension_semantics=("parallel", "arbitrary"))
    if est_vmem > (32 << 20):
        cp_kwargs["vmem_limit_bytes"] = int(min(est_vmem * 5 // 4, budget))

    out2d = pl.pallas_call(
        _ffn_kernel,
        out_shape=jax.ShapeDtypeStruct((M_p, d_model_p), out_dtype),
        grid_spec=pltpu.PrefetchScalarGridSpec(
            num_scalar_prefetch=0,
            grid=grid,
            in_specs=[
                pl.BlockSpec((tm, d_model_p), lambda i, k: (i, 0)),   # x tile (resident over k)
                pl.BlockSpec((d_model_p, tf), lambda i, k: (0, k)),   # w1 chunk
                pl.BlockSpec((1, tf), lambda i, k: (0, k)),           # b1 chunk
                pl.BlockSpec((tf, d_model_p), lambda i, k: (k, 0)),   # w2 chunk
                pl.BlockSpec((1, d_model_p), lambda i, k: (0, 0)),    # b2 (constant)
            ],
            out_specs=pl.BlockSpec((tm, d_model_p), lambda i, k: (i, 0)),
            scratch_shapes=[pltpu.VMEM((tm, d_model_p), jnp.float32)],
        ),
        compiler_params=pltpu.CompilerParams(**cp_kwargs),
    )(x2d, params["w1"], params["b1"], params["w2"], params["b2"])

    if needs_pad:
        out2d = out2d[:M, :d_model]
    return out2d.reshape(batch, seq, d_model)


def _init_linear(key, in_features, out_features):
    """Deterministic init matching nn.Linear's scheme; weight returned pre-transposed
    to (in_features, out_features) plus bias (out_features,)."""
    kw, kb = jax.random.split(key)
    bound = 1.0 / jnp.sqrt(in_features)
    w = jax.random.uniform(kw, (in_features, out_features),
                           minval=-bound, maxval=bound, dtype=jnp.float32)
    b = jax.random.uniform(kb, (out_features,),
                           minval=-bound, maxval=bound, dtype=jnp.float32)
    return w, b


if __name__ == "__main__":
    d_model, d_ff, dropout = 32, 64, 0.1   # dropout unused in eval-mode forward
    batch, seq = 2, 8

    key = jax.random.PRNGKey(0)
    kx, k1, k2 = jax.random.split(key, 3)

    x = jax.random.normal(kx, (batch, seq, d_model), dtype=jnp.float32)
    w1, b1 = _init_linear(k1, d_model, d_ff)   # linear_1: d_model -> d_ff
    w2, b2 = _init_linear(k2, d_ff, d_model)   # linear_2: d_ff -> d_model

    params = prepare_ffn_params(w1, b1, w2, b2)   # one-time pad + bf16 cast
    out = feed_forward_block(x, params)
    out = jax.block_until_ready(out)

    # Pure-JAX reference mimicking kernel numerics (bf16 operands, f32 accumulate).
    x2 = x.reshape(-1, d_model).astype(jnp.bfloat16)
    h_ref = jnp.dot(x2, w1.astype(jnp.bfloat16),
                    preferred_element_type=jnp.float32) + b1
    h_ref = jnp.maximum(h_ref, 0.0)
    ref = (jnp.dot(h_ref.astype(jnp.bfloat16), w2.astype(jnp.bfloat16),
                   preferred_element_type=jnp.float32) + b2).reshape(x.shape)

    assert out.shape == x.shape
    assert out.dtype == x.dtype
    assert jnp.allclose(out, ref.astype(x.dtype), atol=2e-2, rtol=2e-2), \
        "mismatch vs reference"

    print("KERNEL_OK")
</pallas_src>

<mosaic_0001>
module attributes {stable_mosaic.version = 11 : i64} {
  func.func @_ffn_kernel(%arg0: i32, %arg1: i32, %arg2: memref<16x128xf32, #tpu.memory_space<vmem>>, %arg3: memref<128x128xbf16, #tpu.memory_space<vmem>>, %arg4: memref<1x128xf32, #tpu.memory_space<vmem>>, %arg5: memref<128x128xbf16, #tpu.memory_space<vmem>>, %arg6: memref<1x128xf32, #tpu.memory_space<vmem>>, %arg7: memref<16x128xf32, #tpu.memory_space<vmem>>, %arg8: memref<16x128xf32, #tpu.memory_space<vmem>>) attributes {dimension_semantics = [#tpu.dimension_semantics<parallel>, #tpu.dimension_semantics<arbitrary>], iteration_bounds = array<i64: 1, 1>, scalar_prefetch = 0 : i64, scratch_operands = 1 : i64, tpu.core_type = #tpu.core_type<tc>, window_params = [{transform_indices = @transform_0, window_bounds = array<i64: 16, 128>}, {transform_indices = @transform_1, window_bounds = array<i64: 128, 128>}, {transform_indices = @transform_2, window_bounds = array<i64: 1, 128>}, {transform_indices = @transform_3, window_bounds = array<i64: 128, 128>}, {pipeline_mode = #tpu.pipeline_mode<synchronous>, transform_indices = @transform_4, window_bounds = array<i64: 1, 128>}, {transform_indices = @transform_5, window_bounds = array<i64: 16, 128>}]} {
    %c0_i32 = arith.constant 0 : i32
    %0 = arith.cmpi eq, %arg1, %c0_i32 : i32
    %1 = arith.extui %0 : i1 to i32
    %c0_i32_0 = arith.constant 0 : i32
    %2 = arith.cmpi ne, %1, %c0_i32_0 : i32
    scf.if %2 {
      %cst_16 = arith.constant 0.000000e+00 : f32
      %21 = vector.broadcast %cst_16 : f32 to vector<16x128xf32>
      %c0_17 = arith.constant 0 : index
      %c0_18 = arith.constant 0 : index
      %22 = vector.load %arg8[%c0_17, %c0_18] : memref<16x128xf32, #tpu.memory_space<vmem>>, vector<16x128xf32>
      tpu.vector_store %arg8[%c0_17, %c0_18], %21 {strides = array<i32>} : memref<16x128xf32, #tpu.memory_space<vmem>>, vector<16x128xf32>,
    } else {
    }
    %c0 = arith.constant 0 : index
    %c0_1 = arith.constant 0 : index
    %3 = vector.load %arg2[%c0, %c0_1] : memref<16x128xf32, #tpu.memory_space<vmem>>, vector<16x128xf32>
    %4 = arith.truncf %3 : vector<16x128xf32> to vector<16x128xbf16>
    %c0_2 = arith.constant 0 : index
    %c0_3 = arith.constant 0 : index
    %5 = vector.load %arg3[%c0_2, %c0_3] : memref<128x128xbf16, #tpu.memory_space<vmem>>, vector<128x128xbf16>
    %cst = arith.constant dense<0.000000e+00> : vector<16x128xf32>
    %6 = tpu.matmul %4, %5, %cst {dimension_numbers = #tpu.dot_dimension_numbers<[1], [0], [0], [1], [0, 0, 1, 1], [], []>} : vector<16x128xbf16>, vector<128x128xbf16>, vector<16x128xf32> -> vector<16x128xf32>
    %c0_4 = arith.constant 0 : index
    %c0_5 = arith.constant 0 : index
    %7 = vector.load %arg4[%c0_4, %c0_5] : memref<1x128xf32, #tpu.memory_space<vmem>>, vector<1x128xf32>
    %8 = vector.broadcast %7 : vector<1x128xf32> to vector<16x128xf32>
    %9 = arith.addf %6, %8 : vector<16x128xf32>
    %cst_6 = arith.constant 0.000000e+00 : f32
    %10 = vector.broadcast %cst_6 : f32 to vector<16x128xf32>
    %11 = arith.maximumf %9, %10 : vector<16x128xf32>
    %c0_7 = arith.constant 0 : index
    %c0_8 = arith.constant 0 : index
    %12 = vector.load %arg8[%c0_7, %c0_8] : memref<16x128xf32, #tpu.memory_space<vmem>>, vector<16x128xf32>
    %13 = arith.truncf %11 : vector<16x128xf32> to vector<16x128xbf16>
    %c0_9 = arith.constant 0 : index
    %c0_10 = arith.constant 0 : index
    %14 = vector.load %arg5[%c0_9, %c0_10] : memref<128x128xbf16, #tpu.memory_space<vmem>>, vector<128x128xbf16>
    %cst_11 = arith.constant dense<0.000000e+00> : vector<16x128xf32>
    %15 = tpu.matmul %13, %14, %cst_11 {dimension_numbers = #tpu.dot_dimension_numbers<[1], [0], [0], [1], [0, 0, 1, 1], [], []>} : vector<16x128xbf16>, vector<128x128xbf16>, vector<16x128xf32> -> vector<16x128xf32>
    %16 = arith.addf %12, %15 : vector<16x128xf32>
    %c0_12 = arith.constant 0 : index
    %c0_13 = arith.constant 0 : index
    %17 = vector.load %arg8[%c0_12, %c0_13] : memref<16x128xf32, #tpu.memory_space<vmem>>, vector<16x128xf32>
    tpu.vector_store %arg8[%c0_12, %c0_13], %16 {strides = array<i32>} : memref<16x128xf32, #tpu.memory_space<vmem>>, vector<16x128xf32>,
    %c0_i32_14 = arith.constant 0 : i32
    %18 = arith.cmpi eq, %arg1, %c0_i32_14 : i32
    %19 = arith.extui %18 : i1 to i32
    %c0_i32_15 = arith.constant 0 : i32
    %20 = arith.cmpi ne, %19, %c0_i32_15 : i32
    scf.if %20 {
      %c0_16 = arith.constant 0 : index
      %c0_17 = arith.constant 0 : index
      %21 = vector.load %arg8[%c0_16, %c0_17] : memref<16x128xf32, #tpu.memory_space<vmem>>, vector<16x128xf32>
      %c0_18 = arith.constant 0 : index
      %c0_19 = arith.constant 0 : index
      %22 = vector.load %arg6[%c0_18, %c0_19] : memref<1x128xf32, #tpu.memory_space<vmem>>, vector<1x128xf32>
      %23 = vector.broadcast %22 : vector<1x128xf32> to vector<16x128xf32>
      %24 = arith.addf %21, %23 : vector<16x128xf32>
      %c0_20 = arith.constant 0 : index
      %c0_21 = arith.constant 0 : index
      %25 = vector.load %arg7[%c0_20, %c0_21] : memref<16x128xf32, #tpu.memory_space<vmem>>, vector<16x128xf32>
      tpu.vector_store %arg7[%c0_20, %c0_21], %24 {strides = array<i32>} : memref<16x128xf32, #tpu.memory_space<vmem>>, vector<16x128xf32>,
    } else {
    }
    return
  }
  func.func @transform_0(%arg0: i32, %arg1: i32) -> (i32, i32) {
    %c0_i32 = arith.constant 0 : i32
    %c0_i32_0 = arith.constant 0 : i32
    return %arg0, %c0_i32 : i32, i32
  }
  func.func @transform_1(%arg0: i32, %arg1: i32) -> (i32, i32) {
    %c0_i32 = arith.constant 0 : i32
    %c0_i32_0 = arith.constant 0 : i32
    return %c0_i32, %arg1 : i32, i32
  }
  func.func @transform_2(%arg0: i32, %arg1: i32) -> (i32, i32) {
    %c0_i32 = arith.constant 0 : i32
    %c0_i32_0 = arith.constant 0 : i32
    return %c0_i32, %arg1 : i32, i32
  }
  func.func @transform_3(%arg0: i32, %arg1: i32) -> (i32, i32) {
    %c0_i32 = arith.constant 0 : i32
    %c0_i32_0 = arith.constant 0 : i32
    return %arg1, %c0_i32 : i32, i32
  }
  func.func @transform_4(%arg0: i32, %arg1: i32) -> (i32, i32) {
    %c0_i32 = arith.constant 0 : i32
    %c0_i32_0 = arith.constant 0 : i32
    %c0_i32_1 = arith.constant 0 : i32
    return %c0_i32, %c0_i32_0 : i32, i32
  }
  func.func @transform_5(%arg0: i32, %arg1: i32) -> (i32, i32) {
    %c0_i32 = arith.constant 0 : i32
    %c0_i32_0 = arith.constant 0 : i32
    return %arg0, %c0_i32 : i32, i32
  }
}

</mosaic_0001>

<llo_original>
// kernel: tpu_custom_call.1
$region0: #{tpu_custom_call.1}
  #allocation0 [shape = 'u32[]', space=smem, size = 0x4, offset = 0x4, fixed_abs, tag = 'smem constant byte address 0x4 - core index']
  #allocation1 [shape = 'u32[144,128]{1,0:T(1,128)}', space=vmem, size = 0x12000, scoped, tag = 'internal scratch']
  #allocation2 [shape = 'f32[16,128]{1,0:T(8,128)}', space=vmem, size = 0x2000, scoped, tag = 'scratch operand']
  %s0 = inlined_call_operand.hbm [shape: f32[16,128], index: 0, kind: input, shape index: {}]
  %s1 = inlined_call_operand.hbm [shape: bf16[128,128], index: 1, kind: input, shape index: {}]
  %s2 = inlined_call_operand.vmem [shape: f32[1,128], index: 2, kind: input, shape index: {}]
  %s3 = inlined_call_operand.hbm [shape: bf16[128,128], index: 3, kind: input, shape index: {}]
  %s4 = inlined_call_operand.vmem [shape: f32[1,128], index: 4, kind: input, shape index: {}]
  %s5 = inlined_call_operand.hbm [shape: f32[16,128], index: 5, kind: output, shape index: {}]
  %s6 = sld [smem:[#allocation0]]
  $region50: #{tpu_custom_call.1} parent=0
    _
  %s8 = ssub.s32 1, %s6
  %s9 = scalar_select 0, %s8, %s6
  $region1: #{tpu_custom_call.1} parent=0
    #allocation3 [shape = 'u8[8192]{0}', space=vmem, size = 0x2000, scoped, tag = 'input window, operand 0, single buffered']
    #allocation4 [shape = 's32[1]{0}', space=sflag, size = 0x4, scoped, tag = 'scoped memory for tpu_custom_call.1']
    #allocation5 [shape = 's32[1]{0}', space=sflag, size = 0x4, scoped, tag = 'scoped memory for tpu_custom_call.1']
    #allocation6 [shape = 'u8[32768]{0}', space=vmem, size = 0x8000, scoped, tag = 'input window, operand 1, single buffered']
    #allocation7 [shape = 's32[1]{0}', space=sflag, size = 0x4, scoped, tag = 'scoped memory for tpu_custom_call.1']
    #allocation8 [shape = 'u8[32768]{0}', space=vmem, size = 0x8000, scoped, tag = 'input window, operand 3, single buffered']
    #allocation9 [shape = 'u8[8192]{0}', space=vmem, size = 0x2000, scoped, tag = 'output window, operand 0, single buffered']
    %10 = vsyncpa [#allocation4], 0
    %11 = vsyncpa [#allocation7], 0
    %12 = vsyncpa [#allocation5], 0
    // Predicated region
    $region2: #{tpu_custom_call.1} parent=1 // pred_check
      _
    $region3: #{tpu_custom_call.1} parent=1 // pred_check_branch
      %14 = sbr.rel (0) target = $region5
    $region4: #{tpu_custom_call.1} parent=1 // pred_region
      %s16 = ssub.s32 256, 256
      %17 = vsyncadd [#allocation4], %s16
      %s18 = sshll.u32 [#allocation3], 4
      %s19 = int_to_ptr.vmem [resolvable:$true] %s18
      %24 = dma.hbm_to_vmem [thread:$0]  %s0, 256, %s19, [#allocation4], 128, 128, 8
    $region5: #{tpu_custom_call.1} parent=1 // pred_fallthru
      _
    // Predicated region
    $region6: #{tpu_custom_call.1} parent=1 // pred_check
      _
    $region7: #{tpu_custom_call.1} parent=1 // pred_check_branch
      %26 = sbr.rel (0) target = $region9
    $region8: #{tpu_custom_call.1} parent=1 // pred_region
      %s28 = ssub.s32 1024, 1024
      %29 = vsyncadd [#allocation7], %s28
      %s30 = sshll.u32 [#allocation6], 4
      %s31 = int_to_ptr.vmem [resolvable:$true] %s30
      %36 = dma.hbm_to_vmem [thread:$0]  %s1, 1024, %s31, [#allocation7], 64, 64, 4
    $region9: #{tpu_custom_call.1} parent=1 // pred_fallthru
      _
    // Predicated region
    $region10: #{tpu_custom_call.1} parent=1 // pred_check
      _
    $region11: #{tpu_custom_call.1} parent=1 // pred_check_branch
      %38 = sbr.rel (0) target = $region13
    $region12: #{tpu_custom_call.1} parent=1 // pred_region
      _
    $region13: #{tpu_custom_call.1} parent=1 // pred_fallthru
      _
    // Predicated region
    $region14: #{tpu_custom_call.1} parent=1 // pred_check
      _
    $region15: #{tpu_custom_call.1} parent=1 // pred_check_branch
      %40 = sbr.rel (0) target = $region17
    $region16: #{tpu_custom_call.1} parent=1 // pred_region
      %s42 = ssub.s32 1024, 1024
      %43 = vsyncadd [#allocation7], %s42
      %s44 = sshll.u32 [#allocation8], 4
      %s45 = int_to_ptr.vmem [resolvable:$true] %s44
      %50 = dma.hbm_to_vmem [thread:$0]  %s3, 1024, %s45, [#allocation7], 64, 64, 4
    $region17: #{tpu_custom_call.1} parent=1 // pred_fallthru
      _
    // Predicated region
    $region18: #{tpu_custom_call.1} parent=1 // pred_check
      _
    $region19: #{tpu_custom_call.1} parent=1 // pred_check_branch
      %52 = sbr.rel (0) target = $region21
    $region20: #{tpu_custom_call.1} parent=1 // pred_region
      _
    $region21: #{tpu_custom_call.1} parent=1 // pred_fallthru
      _
    // Predicated region
    $region22: #{tpu_custom_call.1} parent=1 // pred_check
      _
    $region23: #{tpu_custom_call.1} parent=1 // pred_check_branch
      %54 = sbr.rel (0) target = $region25
    $region24: #{tpu_custom_call.1} parent=1 // pred_region
      %55 = dma.done [#allocation4], 256
    $region25: #{tpu_custom_call.1} parent=1 // pred_fallthru
      _
    // Predicated region
    $region26: #{tpu_custom_call.1} parent=1 // pred_check
      _
    $region27: #{tpu_custom_call.1} parent=1 // pred_check_branch
      %57 = sbr.rel (0) target = $region29
    $region28: #{tpu_custom_call.1} parent=1 // pred_region
      %58 = dma.done [#allocation7], 1024
    $region29: #{tpu_custom_call.1} parent=1 // pred_fallthru
      _
    // Predicated region
    $region30: #{tpu_custom_call.1} parent=1 // pred_check
      _
    $region31: #{tpu_custom_call.1} parent=1 // pred_check_branch
      %60 = sbr.rel (0) target = $region33
    $region32: #{tpu_custom_call.1} parent=1 // pred_region
      %61 = dma.done [#allocation7], 1024
    $region33: #{tpu_custom_call.1} parent=1 // pred_fallthru
      _
    %p63 = scmp.eq.s32.totalorder 0, 0
    // Predicated region
    $region34: #{tpu_custom_call.1} parent=1 // pred_check
      %p64 = pneg %p63
    $region35: #{tpu_custom_call.1} parent=1 // pred_check_branch
      %66 = sbr.rel (%p64) target = $region37
    $region36: #{tpu_custom_call.1} parent=1 // pred_region
      %67 = vst [vmem:[#allocation2] sm:$0xff] 0.0
      %68 = vst [vmem:[#allocation2 + $0x8] sm:$0xff] 0.0
    $region37: #{tpu_custom_call.1} parent=1 // pred_fallthru
      _
    %v69 = vld [vmem:[#allocation3] sm:$0xff]
    %v70 = vld [vmem:[#allocation3 + $0x8] sm:$0xff]
    %v71 = vpack.c.bf16 %v70, %v69
    %v72 = vld [vmem:[#allocation6] sm:$0xf]
    %v73 = vld [vmem:[#allocation6 + $0x4] sm:$0xf]
    %v74 = vld [vmem:[#allocation6 + $0x8] sm:$0xf]
    %v75 = vld [vmem:[#allocation6 + $0xc] sm:$0xf]
    %v76 = vld [vmem:[#allocation6 + $0x10] sm:$0xf]
    %v77 = vld [vmem:[#allocation6 + $0x14] sm:$0xf]
    %v78 = vld [vmem:[#allocation6 + $0x18] sm:$0xf]
    %v79 = vld [vmem:[#allocation6 + $0x1c] sm:$0xf]
    %v80 = vld [vmem:[#allocation6 + $0x20] sm:$0xf]
    %v81 = vld [vmem:[#allocation6 + $0x24] sm:$0xf]
    %v82 = vld [vmem:[#allocation6 + $0x28] sm:$0xf]
    %v83 = vld [vmem:[#allocation6 + $0x2c] sm:$0xf]
    %v84 = vld [vmem:[#allocation6 + $0x30] sm:$0xf]
    %v85 = vld [vmem:[#allocation6 + $0x34] sm:$0xf]
    %v86 = vld [vmem:[#allocation6 + $0x38] sm:$0xf]
    %v87 = vld [vmem:[#allocation6 + $0x3c] sm:$0xf]
    %v88 = vld [vmem:[%s2] sm:$0x1]
    %v90 = vlaneseq
    %v91 = vshrl.u32 %v90, 7
    %v92 = vsub.s32 0, %v91
    %v93 = vrot.slane %v88, %v92
    %v111 = vunpack.c.l.b16 %v72
    %v112 = vunpack.c.l.b16 %v73
    %v113 = vunpack.c.l.b16 %v74
    %v114 = vunpack.c.l.b16 %v75
    %v115 = vunpack.c.l.b16 %v76
    %v116 = vunpack.c.l.b16 %v77
    %v117 = vunpack.c.l.b16 %v78
    %v118 = vunpack.c.l.b16 %v79
    %v119 = vunpack.c.l.b16 %v80
    %v120 = vunpack.c.l.b16 %v81
    %v121 = vunpack.c.l.b16 %v82
    %v122 = vunpack.c.l.b16 %v83
    %v123 = vunpack.c.l.b16 %v84
    %v124 = vunpack.c.l.b16 %v85
    %v125 = vunpack.c.l.b16 %v86
    %v126 = vunpack.c.l.b16 %v87
    %v127 = vpack.c.b16 %v112, %v111
    %v128 = vpack.c.b16 %v114, %v113
    %v129 = vpack.c.b16 %v116, %v115
    %v130 = vpack.c.b16 %v118, %v117
    %v131 = vpack.c.b16 %v120, %v119
    %v132 = vpack.c.b16 %v122, %v121
    %v133 = vpack.c.b16 %v124, %v123
    %v134 = vpack.c.b16 %v126, %v125
    %143 = vmatprep.subr.bf16.mxu0 0
    %144 = vmatpush1.bf16.msra.mxu0 %v127
    %145 = vmatprep.subr.bf16.mxu0 0
    %146 = vmatpush1.bf16.msra.mxu0 %v128
    %147 = vmatprep.subr.bf16.mxu0 0
    %148 = vmatpush1.bf16.msra.mxu0 %v129
    %149 = vmatprep.subr.bf16.mxu0 0
    %150 = vmatpush1.bf16.msra.mxu0 %v130
    %151 = vmatprep.subr.bf16.mxu0 0
    %152 = vmatpush1.bf16.msra.mxu0 %v131
    %153 = vmatprep.subr.bf16.mxu0 0
    %154 = vmatpush1.bf16.msra.mxu0 %v132
    %155 = vmatprep.subr.bf16.mxu0 0
    %156 = vmatpush1.bf16.msra.mxu0 %v133
    %157 = vmatprep.subr.bf16.mxu0 0
    %158 = vmatpush1.bf16.msra.mxu0 %v134
    %159 = vmatprep.subr.bf16.mxu0 0
    %160 = vmatpush1.bf16.msra.mxu0 0
    %161 = vmatprep.subr.bf16.mxu0 0
    %162 = vmatpush1.bf16.msra.mxu0 0
    %163 = vmatprep.subr.bf16.mxu0 0
    %164 = vmatpush1.bf16.msra.mxu0 0
    %165 = vmatprep.subr.bf16.mxu0 0
    %166 = vmatpush1.bf16.msra.mxu0 0
    %167 = vmatprep.subr.bf16.mxu0 0
    %168 = vmatpush1.bf16.msra.mxu0 0
    %169 = vmatprep.subr.bf16.mxu0 0
    %170 = vmatpush1.bf16.msra.mxu0 0
    %171 = vmatprep.subr.bf16.mxu0 0
    %172 = vmatpush1.bf16.msra.mxu0 0
    %173 = vmatprep.subr.bf16.mxu0 0
    %174 = vmatpush1.bf16.msra.mxu0 0
    %175 = vmatprep.mubr.bf16.mxu0 0
    %176 = vmatmul.mubr.bf16.gmra.mrb[0].mxu0 %v71
    %v177 = vpop.f32.mrb[0].mxu0
    %v178 = vadd.f32 %v93, %v177
    %v179 = vpop.f32.mrb[0].mxu0
    %v180 = vpop.f32.mrb[0].mxu0
    %v181 = vadd.f32 %v93, %v180
    %v182 = vpop.f32.mrb[0].mxu0
    %183 = vdwg.mxu0
    %v184 = vmax.f32 %v178, 0.0
    %v185 = vmax.f32 %v181, 0.0
    %v186 = vld [vmem:[#allocation2] sm:$0xff]
    %v187 = vld [vmem:[#allocation2 + $0x8] sm:$0xff]
    %v188 = vpack.c.bf16 %v185, %v184
    %v189 = vld [vmem:[#allocation8] sm:$0xf]
    %v190 = vld [vmem:[#allocation8 + $0x4] sm:$0xf]
    %v191 = vld [vmem:[#allocation8 + $0x8] sm:$0xf]
    %v192 = vld [vmem:[#allocation8 + $0xc] sm:$0xf]
    %v193 = vld [vmem:[#allocation8 + $0x10] sm:$0xf]
    %v194 = vld [vmem:[#allocation8 + $0x14] sm:$0xf]
    %v195 = vld [vmem:[#allocation8 + $0x18] sm:$0xf]
    %v196 = vld [vmem:[#allocation8 + $0x1c] sm:$0xf]
    %v197 = vld [vmem:[#allocation8 + $0x20] sm:$0xf]
    %v198 = vld [vmem:[#allocation8 + $0x24] sm:$0xf]
    %v199 = vld [vmem:[#allocation8 + $0x28] sm:$0xf]
    %v200 = vld [vmem:[#allocation8 + $0x2c] sm:$0xf]
    %v201 = vld [vmem:[#allocation8 + $0x30] sm:$0xf]
    %v202 = vld [vmem:[#allocation8 + $0x34] sm:$0xf]
    %v203 = vld [vmem:[#allocation8 + $0x38] sm:$0xf]
    %v204 = vld [vmem:[#allocation8 + $0x3c] sm:$0xf]
    %v221 = vunpack.c.l.b16 %v189
    %v222 = vunpack.c.l.b16 %v190
    %v223 = vunpack.c.l.b16 %v191
    %v224 = vunpack.c.l.b16 %v192
    %v225 = vunpack.c.l.b16 %v193
    %v226 = vunpack.c.l.b16 %v194
    %v227 = vunpack.c.l.b16 %v195
    %v228 = vunpack.c.l.b16 %v196
    %v229 = vunpack.c.l.b16 %v197
    %v230 = vunpack.c.l.b16 %v198
    %v231 = vunpack.c.l.b16 %v199
    %v232 = vunpack.c.l.b16 %v200
    %v233 = vunpack.c.l.b16 %v201
    %v234 = vunpack.c.l.b16 %v202
    %v235 = vunpack.c.l.b16 %v203
    %v236 = vunpack.c.l.b16 %v204
    %v237 = vpack.c.b16 %v222, %v221
    %v238 = vpack.c.b16 %v224, %v223
    %v239 = vpack.c.b16 %v226, %v225
    %v240 = vpack.c.b16 %v228, %v227
    %v241 = vpack.c.b16 %v230, %v229
    %v242 = vpack.c.b16 %v232, %v231
    %v243 = vpack.c.b16 %v234, %v233
    %v244 = vpack.c.b16 %v236, %v235
    %253 = vmatprep.subr.bf16.mxu0 0
    %254 = vmatpush1.bf16.msra.mxu0 %v237
    %255 = vmatprep.subr.bf16.mxu0 0
    %256 = vmatpush1.bf16.msra.mxu0 %v238
    %257 = vmatprep.subr.bf16.mxu0 0
    %258 = vmatpush1.bf16.msra.mxu0 %v239
    %259 = vmatprep.subr.bf16.mxu0 0
    %260 = vmatpush1.bf16.msra.mxu0 %v240
    %261 = vmatprep.subr.bf16.mxu0 0
    %262 = vmatpush1.bf16.msra.mxu0 %v241
    %263 = vmatprep.subr.bf16.mxu0 0
    %264 = vmatpush1.bf16.msra.mxu0 %v242
    %265 = vmatprep.subr.bf16.mxu0 0
    %266 = vmatpush1.bf16.msra.mxu0 %v243
    %267 = vmatprep.subr.bf16.mxu0 0
    %268 = vmatpush1.bf16.msra.mxu0 %v244
    %269 = vmatprep.subr.bf16.mxu0 0
    %270 = vmatpush1.bf16.msra.mxu0 0
    %271 = vmatprep.subr.bf16.mxu0 0
    %272 = vmatpush1.bf16.msra.mxu0 0
    %273 = vmatprep.subr.bf16.mxu0 0
    %274 = vmatpush1.bf16.msra.mxu0 0
    %275 = vmatprep.subr.bf16.mxu0 0
    %276 = vmatpush1.bf16.msra.mxu0 0
    %277 = vmatprep.subr.bf16.mxu0 0
    %278 = vmatpush1.bf16.msra.mxu0 0
    %279 = vmatprep.subr.bf16.mxu0 0
    %280 = vmatpush1.bf16.msra.mxu0 0
    %281 = vmatprep.subr.bf16.mxu0 0
    %282 = vmatpush1.bf16.msra.mxu0 0
    %283 = vmatprep.subr.bf16.mxu0 0
    %284 = vmatpush1.bf16.msra.mxu0 0
    %285 = vmatprep.mubr.bf16.mxu0 0
    %286 = vmatmul.mubr.bf16.gmra.mrb[0].mxu0 %v188
    %v287 = vpop.f32.mrb[0].mxu0
    %v288 = vadd.f32 0.0, %v287
    %v289 = vpop.f32.mrb[0].mxu0
    %v290 = vpop.f32.mrb[0].mxu0
    %v291 = vadd.f32 0.0, %v290
    %v292 = vpop.f32.mrb[0].mxu0
    %293 = vdwg.mxu0
    %v294 = vadd.f32 %v186, %v288
    %v295 = vadd.f32 %v187, %v291
    %296 = vst [vmem:[#allocation2] sm:$0xff] %v294
    %297 = vst [vmem:[#allocation2 + $0x8] sm:$0xff] %v295
    // Predicated region
    $region38: #{tpu_custom_call.1} parent=1 // pred_check
      %p298 = pneg %p63
    $region39: #{tpu_custom_call.1} parent=1 // pred_check_branch
      %300 = sbr.rel (%p298) target = $region41
    $region40: #{tpu_custom_call.1} parent=1 // pred_region
      %v301 = vld [vmem:[#allocation2] sm:$0xff]
      %v302 = vld [vmem:[#allocation2 + $0x8] sm:$0xff]
      %v303 = vld [vmem:[%s4] sm:$0x1]
      %v305 = vlaneseq
      %v306 = vshrl.u32 %v305, 7
      %v307 = vsub.s32 0, %v306
      %v308 = vrot.slane %v303, %v307
      %v310 = vadd.f32 %v301, %v308
      %v311 = vadd.f32 %v302, %v308
      %312 = vst [vmem:[#allocation9] sm:$0xff] %v310
      %313 = vst [vmem:[#allocation9 + $0x8] sm:$0xff] %v311
    $region41: #{tpu_custom_call.1} parent=1 // pred_fallthru
      _
    // Predicated region
    $region42: #{tpu_custom_call.1} parent=1 // pred_check
      _
    $region43: #{tpu_custom_call.1} parent=1 // pred_check_branch
      %315 = sbr.rel (0) target = $region45
    $region44: #{tpu_custom_call.1} parent=1 // pred_region
      %s317 = ssub.s32 256, 256
      %318 = vsyncadd [#allocation5], %s317
      %s319 = sshll.u32 [#allocation9], 4
      %s320 = int_to_ptr.vmem [resolvable:$true] %s319
      %325 = dma.vmem_to_hbm [thread:$0]  %s320, 256, %s5, [#allocation5], 128, 128, 8
    $region45: #{tpu_custom_call.1} parent=1 // pred_fallthru
      _
    // Predicated region
    $region46: #{tpu_custom_call.1} parent=1 // pred_check
      _
    $region47: #{tpu_custom_call.1} parent=1 // pred_check_branch
      %327 = sbr.rel (0) target = $region49
    $region48: #{tpu_custom_call.1} parent=1 // pred_region
      %328 = dma.done [#allocation5], 256
    $region49: #{tpu_custom_call.1} parent=1 // pred_fallthru
      _
    %329 = vsyncpa [#allocation4], 1
    %330 = vsyncpa [#allocation7], 1
    %331 = vsyncpa [#allocation5], 1

</llo_original>
